<compile_context>
chip_gen: v7x
topology: tpu7x:2x2x1
jax: 0.10.0
libtpu: 0.0.40
codegen_flags: <defaults>
</compile_context>

<pallas_src>
import functools
import math

import jax
import jax.numpy as jnp
from jax.experimental import pallas as pl
from jax.experimental.pallas import tpu as pltpu


# --------------------- kernel 1: 1x1 conv + folded BN/gate + ReLU ---------------------
def _conv1x1_relu_kernel(x_ref, w_ref, shift_ref, o_ref):
    acc = jnp.dot(x_ref[...], w_ref[...], preferred_element_type=jnp.float32)
    o_ref[...] = jnp.maximum(acc + shift_ref[...], 0.0).astype(o_ref.dtype)


def conv1x1_relu(x3d, w, shift, out_dtype=jnp.bfloat16):
    N, M, Cin = x3d.shape
    Cout = w.shape[1]
    return pl.pallas_call(
        _conv1x1_relu_kernel,
        out_shape=jax.ShapeDtypeStruct((N, M, Cout), out_dtype),
        grid_spec=pltpu.PrefetchScalarGridSpec(
            num_scalar_prefetch=0,
            grid=(N,),
            in_specs=[
                pl.BlockSpec((None, M, Cin), lambda n: (n, 0, 0)),
                pl.BlockSpec((Cin, Cout), lambda n: (0, 0)),   # resident weights
                pl.BlockSpec((1, Cout), lambda n: (0, 0)),
            ],
            out_specs=pl.BlockSpec((None, M, Cout), lambda n: (n, 0, 0)),
        ),
        compiler_params=pltpu.CompilerParams(dimension_semantics=("parallel",)),
    )(x3d, w, shift.reshape(1, Cout))


# ------------- kernel 2: 3x3 conv (pad=1, stride) with in-VMEM im2col + ReLU ----------
def _conv3x3_relu_kernel(xp_ref, w_ref, shift_ref, o_ref, patch_ref, *,
                         stride, Ho, Wo, C):
    # xp_ref: (Hp, Wps, stride*C)  padded conv1 output; the W stride-phase is folded into
    #         the lane dim by a free wrapper reshape, so taps below are unit-stride slices.
    # w_ref:  (9*C, Cout) rows ordered [kh, kw, cin];  shift_ref: (1, Cout)
    # o_ref:  (Ho*Wo, Cout);  patch_ref: VMEM scratch (Ho*Wo, 9*C)
    s = stride
    for i in range(Ho):                       # static trip count -> fully unrolled
        taps = []
        for kh in range(3):
            row = s * i + kh
            for kw in range(3):
                taps.append(xp_ref[row, pl.ds(kw // s, Wo), pl.ds((kw % s) * C, C)])
        patch_ref[pl.ds(i * Wo, Wo), :] = jnp.concatenate(taps, axis=-1)
    acc = jnp.dot(patch_ref[...], w_ref[...], preferred_element_type=jnp.float32)
    o_ref[...] = jnp.maximum(acc + shift_ref[...], 0.0).astype(o_ref.dtype)


def conv3x3_relu(xp_phased, w, shift, stride, Ho, Wo, C, out_dtype=jnp.bfloat16):
    N, Hp, Wps, CL = xp_phased.shape          # CL == stride * C
    Cout = w.shape[1]
    kernel = functools.partial(_conv3x3_relu_kernel, stride=stride, Ho=Ho, Wo=Wo, C=C)
    return pl.pallas_call(
        kernel,
        out_shape=jax.ShapeDtypeStruct((N, Ho * Wo, Cout), out_dtype),
        grid_spec=pltpu.PrefetchScalarGridSpec(
            num_scalar_prefetch=0,
            grid=(N,),
            in_specs=[
                pl.BlockSpec((None, Hp, Wps, CL), lambda n: (n, 0, 0, 0)),
                pl.BlockSpec((9 * C, Cout), lambda n: (0, 0)),
                pl.BlockSpec((1, Cout), lambda n: (0, 0)),
            ],
            out_specs=pl.BlockSpec((None, Ho * Wo, Cout), lambda n: (n, 0, 0)),
            scratch_shapes=[pltpu.VMEM((Ho * Wo, 9 * C), xp_phased.dtype)],
        ),
        compiler_params=pltpu.CompilerParams(dimension_semantics=("parallel",)),
    )(xp_phased, w, shift.reshape(1, Cout))


# ------- kernel 3: conv3 (1x1) + BN3 + shortcut conv(+BN) + residual add + ReLU -------
def _conv3_residual_sc_kernel(y_ref, x_ref, w3_ref, wsc_ref, shift_ref, o_ref, xs_ref, *,
                              stride, Ho, Wo, Cin):
    # x_ref: (H, ceil(W/stride), stride*Cin) phase-folded view of the block input;
    # subsample it (H stride via the row loop, W stride via the lane phase) into VMEM.
    for i in range(Ho):
        xs_ref[pl.ds(i * Wo, Wo), :] = x_ref[stride * i, pl.ds(0, Wo), pl.ds(0, Cin)]
    main = jnp.dot(y_ref[...], w3_ref[...], preferred_element_type=jnp.float32)
    sc = jnp.dot(xs_ref[...], wsc_ref[...], preferred_element_type=jnp.float32)
    o_ref[...] = jnp.maximum(main + sc + shift_ref[...], 0.0).astype(o_ref.dtype)


def conv3_residual_sc(y, x_phased, w3, wsc, shift, stride, Ho, Wo, Cin):
    N, M, Cmid = y.shape
    Cout = w3.shape[1]
    _, H, Wps, CL = x_phased.shape
    kernel = functools.partial(_conv3_residual_sc_kernel,
                               stride=stride, Ho=Ho, Wo=Wo, Cin=Cin)
    return pl.pallas_call(
        kernel,
        out_shape=jax.ShapeDtypeStruct((N, M, Cout), jnp.float32),
        grid_spec=pltpu.PrefetchScalarGridSpec(
            num_scalar_prefetch=0,
            grid=(N,),
            in_specs=[
                pl.BlockSpec((None, M, Cmid), lambda n: (n, 0, 0)),
                pl.BlockSpec((None, H, Wps, CL), lambda n: (n, 0, 0, 0)),
                pl.BlockSpec((Cmid, Cout), lambda n: (0, 0)),
                pl.BlockSpec((Cin, Cout), lambda n: (0, 0)),
                pl.BlockSpec((1, Cout), lambda n: (0, 0)),
            ],
            out_specs=pl.BlockSpec((None, M, Cout), lambda n: (n, 0, 0)),
            scratch_shapes=[pltpu.VMEM((Ho * Wo, Cin), x_phased.dtype)],
        ),
        compiler_params=pltpu.CompilerParams(dimension_semantics=("parallel",)),
    )(y, x_phased, w3, wsc, shift.reshape(1, Cout))


def _conv3_residual_id_kernel(y_ref, x_ref, w3_ref, shift_ref, o_ref):
    main = jnp.dot(y_ref[...], w3_ref[...], preferred_element_type=jnp.float32)
    out = jnp.maximum(main + x_ref[...].astype(jnp.float32) + shift_ref[...], 0.0)
    o_ref[...] = out.astype(o_ref.dtype)


def conv3_residual_id(y, x2d, w3, shift):
    N, M, Cmid = y.shape
    Cout = w3.shape[1]
    return pl.pallas_call(
        _conv3_residual_id_kernel,
        out_shape=jax.ShapeDtypeStruct((N, M, Cout), jnp.float32),
        grid_spec=pltpu.PrefetchScalarGridSpec(
            num_scalar_prefetch=0,
            grid=(N,),
            in_specs=[
                pl.BlockSpec((None, M, Cmid), lambda n: (n, 0, 0)),
                pl.BlockSpec((None, M, Cout), lambda n: (n, 0, 0)),
                pl.BlockSpec((Cmid, Cout), lambda n: (0, 0)),
                pl.BlockSpec((1, Cout), lambda n: (0, 0)),
            ],
            out_specs=pl.BlockSpec((None, M, Cout), lambda n: (n, 0, 0)),
        ),
        compiler_params=pltpu.CompilerParams(dimension_semantics=("parallel",)),
    )(y, x2d, w3, shift.reshape(1, Cout))


# -------------------------------- glue / parameters -----------------------------------
def _fold_bn(bn, eps=1e-5):
    gamma, beta, mean, var = bn
    scale = gamma / jnp.sqrt(var + eps)
    shift = beta - mean * scale
    return scale, shift


def _phase_fold_w(x, s):
    """(N, H, W, C) -> (N, H, ceil(W/s), s*C). Pure (free) reshape when s | W."""
    N, H, W, C = x.shape
    Wpad = -(-W // s) * s
    if Wpad != W:
        x = jnp.pad(x, ((0, 0), (0, 0), (0, Wpad - W), (0, 0)))
    return x.reshape(N, H, Wpad // s, s * C)


def make_params(key, in_channels, out_channels, stride):
    exp = 4
    Cin, Cmid, Cout = in_channels, out_channels, out_channels * exp
    ks = list(jax.random.split(key, 10))

    def conv_w(k, cout, cin, kh, kw):
        fan_in = cin * kh * kw
        return jax.random.normal(k, (cout, cin, kh, kw), jnp.float32) / math.sqrt(fan_in)

    def bn_p(k, c):
        k1, k2, k3, k4 = jax.random.split(k, 4)
        return (1.0 + 0.1 * jax.random.normal(k1, (c,), jnp.float32),
                0.1 * jax.random.normal(k2, (c,), jnp.float32),
                0.1 * jax.random.normal(k3, (c,), jnp.float32),
                jax.random.uniform(k4, (c,), jnp.float32, 0.5, 1.5))

    # PyTorch-layout conv weights (Cout, Cin, kh, kw) -> matmul layout.
    w1 = jnp.transpose(conv_w(ks[0], Cmid, Cin, 1, 1)[:, :, 0, 0], (1, 0))        # (Cin, Cmid)
    w2 = jnp.transpose(conv_w(ks[1], Cmid, Cmid, 3, 3), (2, 3, 1, 0)).reshape(9 * Cmid, Cmid)
    w3 = jnp.transpose(conv_w(ks[2], Cout, Cmid, 1, 1)[:, :, 0, 0], (1, 0))       # (Cmid, Cout)

    s1, b1 = _fold_bn(bn_p(ks[3], Cmid))
    s2, b2 = _fold_bn(bn_p(ks[4], Cmid))
    s3, b3 = _fold_bn(bn_p(ks[5], Cout))
    # Deterministic eval-time hard-concrete channel gates (>= 0).
    g1 = jax.nn.sigmoid(jax.random.normal(ks[6], (Cmid,), jnp.float32))
    g2 = jax.nn.sigmoid(jax.random.normal(ks[7], (Cmid,), jnp.float32))

    has_sc = (stride != 1) or (Cin != Cout)
    params = {
        "stride": stride,
        "has_sc": has_sc,
        # gate >= 0 commutes with ReLU, so BN scale * gate folds into the weights once.
        "w1": (w1 * (s1 * g1)[None, :]).astype(jnp.bfloat16),
        "shift1": (b1 * g1).astype(jnp.float32),
        "w2": (w2 * (s2 * g2)[None, :]).astype(jnp.bfloat16),
        "shift2": (b2 * g2).astype(jnp.float32),
        "w3": (w3 * s3[None, :]).astype(jnp.bfloat16),
    }
    if has_sc:
        wsc = jnp.transpose(conv_w(ks[8], Cout, Cin, 1, 1)[:, :, 0, 0], (1, 0))   # (Cin, Cout)
        ssc, bsc = _fold_bn(bn_p(ks[9], Cout))
        params["wsc"] = (wsc * ssc[None, :]).astype(jnp.bfloat16)
        params["shift_out"] = (b3 + bsc).astype(jnp.float32)   # combined BN3 + sc_bn shift
    else:
        params["shift_out"] = b3.astype(jnp.float32)
    return params


def bottleneck_forward(x_nchw, params):
    """NCHW in / NCHW out, matching the PyTorch module's forward (eval mode)."""
    stride = params["stride"]
    x = jnp.transpose(x_nchw, (0, 2, 3, 1)).astype(jnp.bfloat16)     # NHWC, bf16 for the MXU
    N, H, W, Cin = x.shape
    Cmid = params["w1"].shape[1]
    Cout = params["w3"].shape[1]
    Ho = (H - 1) // stride + 1
    Wo = (W - 1) // stride + 1

    # conv1 (1x1) -> bn1 -> relu1 -> sparse1 gate  (BN scale & gate folded into w1/shift1)
    y1 = conv1x1_relu(x.reshape(N, H * W, Cin), params["w1"], params["shift1"])

    # conv2 (3x3, pad=1, stride) -> bn2 -> relu2 -> sparse2 gate.
    # Wrapper only zero-pads + does a free phase-fold reshape; im2col happens in VMEM.
    y1p = jnp.pad(y1.reshape(N, H, W, Cmid), ((0, 0), (1, 1), (1, 1), (0, 0)))
    y2 = conv3x3_relu(_phase_fold_w(y1p, stride), params["w2"], params["shift2"],
                      stride, Ho, Wo, Cmid)

    # conv3 (1x1) -> bn3, shortcut conv(+BN), residual add, final ReLU: one fused kernel.
    if params["has_sc"]:
        out = conv3_residual_sc(y2, _phase_fold_w(x, stride), params["w3"], params["wsc"],
                                params["shift_out"], stride, Ho, Wo, Cin)
    else:
        out = conv3_residual_id(y2, x.reshape(N, H * W, Cin), params["w3"],
                                params["shift_out"])

    out = out.reshape(N, Ho, Wo, Cout)
    return jnp.transpose(out, (0, 3, 1, 2))                          # back to NCHW


# ---------------------------------------------------------------------------------------
if __name__ == "__main__":
    # BottleNeck(in_channels=64, out_channels=32, stride=2): Cout = 128 (lane-dense output).
    batch, in_channels, out_channels, spatial, stride = 2, 64, 32, 16, 2

    key = jax.random.PRNGKey(0)
    k_x, k_p = jax.random.split(key)
    x = jax.random.normal(k_x, (batch, in_channels, spatial, spatial), jnp.float32)  # NCHW
    params = make_params(k_p, in_channels, out_channels, stride)

    out = jax.block_until_ready(bottleneck_forward(x, params))
    assert out.shape == (batch, out_channels * 4, spatial // stride, spatial // stride)
    assert out.dtype == jnp.float32
    assert bool(jnp.all(out >= 0.0))   # final ReLU
    print("KERNEL_OK")
</pallas_src>

<mosaic_0001>
module attributes {stable_mosaic.version = 11 : i64} {
  func.func @_conv1x1_relu_kernel(%arg0: i32, %arg1: memref<1x256x64xbf16, #tpu.memory_space<vmem>>, %arg2: memref<64x32xbf16, #tpu.memory_space<vmem>>, %arg3: memref<1x32xf32, #tpu.memory_space<vmem>>, %arg4: memref<1x256x32xbf16, #tpu.memory_space<vmem>>) attributes {dimension_semantics = [#tpu.dimension_semantics<parallel>], iteration_bounds = array<i64: 2>, scalar_prefetch = 0 : i64, scratch_operands = 0 : i64, tpu.core_type = #tpu.core_type<tc>, window_params = [{transform_indices = @transform_0, window_bounds = array<i64: 1, 256, 64>}, {pipeline_mode = #tpu.pipeline_mode<synchronous>, transform_indices = @transform_1, window_bounds = array<i64: 64, 32>}, {pipeline_mode = #tpu.pipeline_mode<synchronous>, transform_indices = @transform_2, window_bounds = array<i64: 1, 32>}, {transform_indices = @transform_3, window_bounds = array<i64: 1, 256, 32>}]} {
    %c0 = arith.constant 0 : index
    %c0_0 = arith.constant 0 : index
    %c0_1 = arith.constant 0 : index
    %0 = vector.load %arg1[%c0, %c0_0, %c0_1] : memref<1x256x64xbf16, #tpu.memory_space<vmem>>, vector<1x256x64xbf16>
    %1 = vector.shape_cast %0 : vector<1x256x64xbf16> to vector<256x64xbf16>
    %c0_2 = arith.constant 0 : index
    %c0_3 = arith.constant 0 : index
    %2 = vector.load %arg2[%c0_2, %c0_3] : memref<64x32xbf16, #tpu.memory_space<vmem>>, vector<64x32xbf16>
    %cst = arith.constant dense<0.000000e+00> : vector<256x32xf32>
    %3 = tpu.matmul %1, %2, %cst {dimension_numbers = #tpu.dot_dimension_numbers<[1], [0], [0], [1], [0, 0, 1, 1], [], []>} : vector<256x64xbf16>, vector<64x32xbf16>, vector<256x32xf32> -> vector<256x32xf32>
    %c0_4 = arith.constant 0 : index
    %c0_5 = arith.constant 0 : index
    %4 = vector.load %arg3[%c0_4, %c0_5] : memref<1x32xf32, #tpu.memory_space<vmem>>, vector<1x32xf32>
    %5 = vector.broadcast %4 : vector<1x32xf32> to vector<256x32xf32>
    %6 = arith.addf %3, %5 : vector<256x32xf32>
    %cst_6 = arith.constant 0.000000e+00 : f32
    %7 = vector.broadcast %cst_6 : f32 to vector<256x32xf32>
    %8 = arith.maximumf %6, %7 : vector<256x32xf32>
    %9 = arith.truncf %8 : vector<256x32xf32> to vector<256x32xbf16>
    %c0_7 = arith.constant 0 : index
    %c0_8 = arith.constant 0 : index
    %c0_9 = arith.constant 0 : index
    %10 = vector.load %arg4[%c0_7, %c0_8, %c0_9] : memref<1x256x32xbf16, #tpu.memory_space<vmem>>, vector<1x256x32xbf16>
    %11 = vector.shape_cast %10 : vector<1x256x32xbf16> to vector<256x32xbf16>
    %12 = vector.shape_cast %9 : vector<256x32xbf16> to vector<1x256x32xbf16>
    tpu.vector_store %arg4[%c0_7, %c0_8, %c0_9], %12 {strides = array<i32>} : memref<1x256x32xbf16, #tpu.memory_space<vmem>>, vector<1x256x32xbf16>,
    return
  }
  func.func @transform_0(%arg0: i32) -> (i32, i32, i32) {
    %c0_i32 = arith.constant 0 : i32
    %c0_i32_0 = arith.constant 0 : i32
    %c0_i32_1 = arith.constant 0 : i32
    return %arg0, %c0_i32, %c0_i32_0 : i32, i32, i32
  }
  func.func @transform_1(%arg0: i32) -> (i32, i32) {
    %c0_i32 = arith.constant 0 : i32
    %c0_i32_0 = arith.constant 0 : i32
    %c0_i32_1 = arith.constant 0 : i32
    return %c0_i32, %c0_i32_0 : i32, i32
  }
  func.func @transform_2(%arg0: i32) -> (i32, i32) {
    %c0_i32 = arith.constant 0 : i32
    %c0_i32_0 = arith.constant 0 : i32
    %c0_i32_1 = arith.constant 0 : i32
    return %c0_i32, %c0_i32_0 : i32, i32
  }
  func.func @transform_3(%arg0: i32) -> (i32, i32, i32) {
    %c0_i32 = arith.constant 0 : i32
    %c0_i32_0 = arith.constant 0 : i32
    %c0_i32_1 = arith.constant 0 : i32
    return %arg0, %c0_i32, %c0_i32_0 : i32, i32, i32
  }
}

</mosaic_0001>

<llo_original>
// kernel: tpu_custom_call.1
$region0: #{tpu_custom_call.1}
  #allocation0 [shape = 'u32[]', space=smem, size = 0x4, offset = 0x4, fixed_abs, tag = 'smem constant byte address 0x4 - core index']
  #allocation1 [shape = 'u32[144,128]{1,0:T(1,128)}', space=vmem, size = 0x12000, scoped, tag = 'internal scratch']
  %s0 = inlined_call_operand.vmem [shape: bf16[2,256,64], index: 0, kind: input, shape index: {}]
  %s1 = inlined_call_operand.vmem [shape: bf16[64,32], index: 1, kind: input, shape index: {}]
  %s2 = inlined_call_operand.vmem [shape: f32[1,32], index: 2, kind: input, shape index: {}]
  %s3 = inlined_call_operand.vmem [shape: bf16[2,256,32], index: 3, kind: output, shape index: {}]
  %s4 = sld [smem:[#allocation0]]
  $region45: #{tpu_custom_call.1} parent=0
    _
  %s6 = ssub.s32 1, %s4
  %s7 = scalar_select 0, %s6, %s4
  loop: start=0, step=1, limit=4
  $region2: #{tpu_custom_call.1} parent=0 // loop_pre_header
    _
  $region3: #{tpu_custom_call.1} parent=0 // loop_header
    %s9 = sphi 0, %s13
    %p10 = scmp.ge.s32.totalorder %s9, 4
    %s19 = sphi 0, %s21
    %s22 = sphi 0, %s19
    %s23 = sphi 0, %s22
    %s39 = sphi 0, %s23
    %s43 = sphi 0, %s43
    %s45 = sphi 0, %s43
    %s46 = sphi 0, %s45
    %s60 = sphi 0, %s46
    %s64 = sphi 0, %s64
    %s66 = sphi 0, %s64
    %s67 = sphi 0, %s66
    %s81 = sphi 0, %s67
    %s87 = sphi 0, %s89
    %s90 = sphi 0, %s87
    %s91 = sphi 0, %s90
    %s107 = sphi 0, %s91
  $region4: #{tpu_custom_call.1} parent=0 // loop_header_branch
    %12 = sbr.rel (%p10) target = $region8
  $region5: #{tpu_custom_call.1} parent=0 // loop_body
    %s14 = ssub.s32 %s9, 1
    %s15 = ssub.s32 %s9, 2
    %s16 = sadd.s32 %s9, 1
    %s17 = ssub.s32 %s9, %s16
    %p18 = scmp.eq.s32.totalorder %s17, 0
    %s20 = sadd.s32 %s19, 1
    %s21 = scalar_select %p18, %s19, %s20
    %p24 = pneg %p18
    %p25 = scmp.eq.s32.totalorder %s9, 1
    %p26 = por %p24, %p25
    %p27 = scmp.ne.s32.totalorder %s19, %s22
    %p28 = scmp.eq.s32.totalorder %s9, 0
    %p29 = por %p27, %p28
    %p30 = scmp.ne.s32.totalorder %s19, %s22
    %p31 = scmp.eq.s32.totalorder %s14, 1
    %p32 = por %p30, %p31
    %p33 = scmp.ne.s32.totalorder %s22, %s23
    %p34 = scmp.eq.s32.totalorder %s14, 0
    %p35 = por %p33, %p34
    %p36 = scmp.ne.s32.totalorder %s22, %s23
    %p37 = scmp.eq.s32.totalorder %s15, 1
    %p38 = por %p36, %p37
    %p40 = scmp.ne.s32.totalorder %s23, %s39
    %p41 = scmp.eq.s32.totalorder %s15, 0
    %p42 = por %p40, %p41
    %s44 = sadd.s32 %s43, 1
    %p47 = scmp.eq.s32.totalorder %s9, 1
    %p48 = scmp.ne.s32.totalorder %s43, %s45
    %p49 = scmp.eq.s32.totalorder %s9, 0
    %p50 = por %p48, %p49
    %p51 = scmp.ne.s32.totalorder %s43, %s45
    %p52 = scmp.eq.s32.totalorder %s14, 1
    %p53 = por %p51, %p52
    %p54 = scmp.ne.s32.totalorder %s45, %s46
    %p55 = scmp.eq.s32.totalorder %s14, 0
    %p56 = por %p54, %p55
    %p57 = scmp.ne.s32.totalorder %s45, %s46
    %p58 = scmp.eq.s32.totalorder %s15, 1
    %p59 = por %p57, %p58
    %p61 = scmp.ne.s32.totalorder %s46, %s60
    %p62 = scmp.eq.s32.totalorder %s15, 0
    %p63 = por %p61, %p62
    %s65 = sadd.s32 %s64, 1
    %p68 = scmp.eq.s32.totalorder %s9, 1
    %p69 = scmp.ne.s32.totalorder %s64, %s66
    %p70 = scmp.eq.s32.totalorder %s9, 0
    %p71 = por %p69, %p70
    %p72 = scmp.ne.s32.totalorder %s64, %s66
    %p73 = scmp.eq.s32.totalorder %s14, 1
    %p74 = por %p72, %p73
    %p75 = scmp.ne.s32.totalorder %s66, %s67
    %p76 = scmp.eq.s32.totalorder %s14, 0
    %p77 = por %p75, %p76
    %p78 = scmp.ne.s32.totalorder %s66, %s67
    %p79 = scmp.eq.s32.totalorder %s15, 1
    %p80 = por %p78, %p79
    %p82 = scmp.ne.s32.totalorder %s67, %s81
    %p83 = scmp.eq.s32.totalorder %s15, 0
    %p84 = por %p82, %p83
    %s85 = ssub.s32 %s9, %s16
    %p86 = scmp.eq.s32.totalorder %s85, 0
    %s88 = sadd.s32 %s87, 1
    %s89 = scalar_select %p86, %s87, %s88
    %p92 = pneg %p86
    %p93 = scmp.eq.s32.totalorder %s9, 1
    %p94 = por %p92, %p93
    %p95 = scmp.ne.s32.totalorder %s87, %s90
    %p96 = scmp.eq.s32.totalorder %s9, 0
    %p97 = por %p95, %p96
    %p98 = scmp.ne.s32.totalorder %s87, %s90
    %p99 = scmp.eq.s32.totalorder %s14, 1
    %p100 = por %p98, %p99
    %p101 = scmp.ne.s32.totalorder %s90, %s91
    %p102 = scmp.eq.s32.totalorder %s14, 0
    %p103 = por %p101, %p102
    %p104 = scmp.ne.s32.totalorder %s90, %s91
    %p105 = scmp.eq.s32.totalorder %s15, 1
    %p106 = por %p104, %p105
    %p108 = scmp.ne.s32.totalorder %s91, %s107
    %p109 = scmp.eq.s32.totalorder %s15, 0
    %p110 = por %p108, %p109
    %p111 = scmp.le.s32.totalorder 1, %s9
    %p112 = scmp.lt.s32.totalorder %s9, 3
    %p113 = pnand %p111, %p112
    %p114 = pneg %p113
    // Predicated region
    $region9: #{tpu_custom_call.1} parent=5 // pred_check
      _
    $region10: #{tpu_custom_call.1} parent=5 // pred_check_branch
      %116 = sbr.rel (%p113) target = $region12
    $region11: #{tpu_custom_call.1} parent=5 // pred_region
      %s117 = ssub.s32 %s9, 1
      // Predicated region
      $region13: #{tpu_custom_call.1} parent=11 // pred_check
        %p118 = pneg %p56
      $region14: #{tpu_custom_call.1} parent=11 // pred_check_branch
        %120 = sbr.rel (%p118) target = $region16
      $region15: #{tpu_custom_call.1} parent=11 // pred_region
        _
      $region16: #{tpu_custom_call.1} parent=11 // pred_fallthru
        _
      // Predicated region
      $region17: #{tpu_custom_call.1} parent=11 // pred_check
        %p121 = pneg %p77
      $region18: #{tpu_custom_call.1} parent=11 // pred_check_branch
        %123 = sbr.rel (%p121) target = $region20
      $region19: #{tpu_custom_call.1} parent=11 // pred_region
        _
      $region20: #{tpu_custom_call.1} parent=11 // pred_fallthru
        _
    $region12: #{tpu_custom_call.1} parent=5 // pred_fallthru
      _
    %p124 = scmp.lt.s32.totalorder %s9, 2
    // Predicated region
    $region21: #{tpu_custom_call.1} parent=5 // pred_check
      %p125 = pneg %p124
    $region22: #{tpu_custom_call.1} parent=5 // pred_check_branch
      %127 = sbr.rel (%p125) target = $region24
    $region23: #{tpu_custom_call.1} parent=5 // pred_region
      // Predicated region
      $region25: #{tpu_custom_call.1} parent=23 // pred_check
        %p128 = pneg %p29
      $region26: #{tpu_custom_call.1} parent=23 // pred_check_branch
        %130 = sbr.rel (%p128) target = $region28
      $region27: #{tpu_custom_call.1} parent=23 // pred_region
        %p131 = scmp.lt.s32.totalorder %s9, 1
        %s132 = scalar_select %p131, %s9, 1
        %s133 = smul.addr %s132, 32
        %s134 = smul.addr %s133, 4
        %s135 = scalar_lea.vmem %s0, %s134
      $region28: #{tpu_custom_call.1} parent=23 // pred_fallthru
        _
    $region24: #{tpu_custom_call.1} parent=5 // pred_fallthru
      _
    %p136 = scmp.le.s32.totalorder 1, %s9
    %p137 = scmp.lt.s32.totalorder %s9, 3
    %p138 = pnand %p136, %p137
    %p139 = pneg %p138
    // Predicated region
    $region29: #{tpu_custom_call.1} parent=5 // pred_check
      _
    $region30: #{tpu_custom_call.1} parent=5 // pred_check_branch
      %141 = sbr.rel (%p138) target = $region32
    $region31: #{tpu_custom_call.1} parent=5 // pred_region
      %s142 = ssub.s32 %s9, 1
      %p143 = scmp.lt.s32.totalorder %s14, 1
      %s144 = scalar_select %p143, %s14, 1
      %s145 = smul.addr %s144, 32
      %s146 = smul.addr %s145, 4
      %s147 = scalar_lea.vmem %s0, %s146
      %p148 = pneg %p35
      %p149 = pneg %p32
      %p150 = pneg %p56
      %p151 = pneg %p53
      %p152 = pneg %p77
      %p153 = pneg %p74
      %p154 = pneg %p103
      %p155 = pneg %p100
      %p156 = scmp.lt.s32.totalorder %s14, 1
      %s157 = scalar_select %p156, %s14, 1
      %s158 = smul.addr %s157, 32
      %s159 = smul.addr %s158, 4
      %s160 = scalar_lea.vmem %s3, %s159
      %p161 = scmp.lt.s32.totalorder %s14, 1
      %s162 = scalar_select %p161, %s14, 1
      %s163 = smul.addr %s162, 32
      %s164 = smul.addr %s163, 4
      %s165 = scalar_lea.vmem %s0, %s164
      %p166 = scmp.lt.s32.totalorder %s14, 1
      %s167 = scalar_select %p166, %s14, 1
      %s168 = smul.addr %s167, 32
      %s169 = smul.addr %s168, 4
      %s170 = scalar_lea.vmem %s3, %s169
      %v172 = vld [vmem:[%s165] sm:$0xf]
      %v173 = vld [vmem:[%s165 + $0x4] sm:$0xf]
      %v174 = vld [vmem:[%s165 + $0x8] sm:$0xf]
      %v175 = vld [vmem:[%s165 + $0xc] sm:$0xf]
      %v176 = vld [vmem:[%s165 + $0x10] sm:$0xf]
      %v177 = vld [vmem:[%s165 + $0x14] sm:$0xf]
      %v178 = vld [vmem:[%s165 + $0x18] sm:$0xf]
      %v179 = vld [vmem:[%s165 + $0x1c] sm:$0xf]
      %v180 = vld [vmem:[%s165 + $0x20] sm:$0xf]
      %v181 = vld [vmem:[%s165 + $0x24] sm:$0xf]
      %v182 = vld [vmem:[%s165 + $0x28] sm:$0xf]
      %v183 = vld [vmem:[%s165 + $0x2c] sm:$0xf]
      %v184 = vld [vmem:[%s165 + $0x30] sm:$0xf]
      %v185 = vld [vmem:[%s165 + $0x34] sm:$0xf]
      %v186 = vld [vmem:[%s165 + $0x38] sm:$0xf]
      %v187 = vld [vmem:[%s165 + $0x3c] sm:$0xf]
      %v188 = vld [vmem:[%s165 + $0x40] sm:$0xf]
      %v189 = vld [vmem:[%s165 + $0x44] sm:$0xf]
      %v190 = vld [vmem:[%s165 + $0x48] sm:$0xf]
      %v191 = vld [vmem:[%s165 + $0x4c] sm:$0xf]
      %v192 = vld [vmem:[%s165 + $0x50] sm:$0xf]
      %v193 = vld [vmem:[%s165 + $0x54] sm:$0xf]
      %v194 = vld [vmem:[%s165 + $0x58] sm:$0xf]
      %v195 = vld [vmem:[%s165 + $0x5c] sm:$0xf]
      %v196 = vld [vmem:[%s165 + $0x60] sm:$0xf]
      %v197 = vld [vmem:[%s165 + $0x64] sm:$0xf]
      %v198 = vld [vmem:[%s165 + $0x68] sm:$0xf]
      %v199 = vld [vmem:[%s165 + $0x6c] sm:$0xf]
      %v200 = vld [vmem:[%s165 + $0x70] sm:$0xf]
      %v201 = vld [vmem:[%s165 + $0x74] sm:$0xf]
      %v202 = vld [vmem:[%s165 + $0x78] sm:$0xf]
      %v203 = vld [vmem:[%s165 + $0x7c] sm:$0xf]
      %v204 = vld [vmem:[%s1] sm:$0xf]
      %v205 = vld [vmem:[%s1 + $0x4] sm:$0xf]
      %v206 = vld [vmem:[%s1 + $0x8] sm:$0xf]
      %v207 = vld [vmem:[%s1 + $0xc] sm:$0xf]
      %v208 = vld [vmem:[%s1 + $0x10] sm:$0xf]
      %v209 = vld [vmem:[%s1 + $0x14] sm:$0xf]
      %v210 = vld [vmem:[%s1 + $0x18] sm:$0xf]
      %v211 = vld [vmem:[%s1 + $0x1c] sm:$0xf]
      %v212 = vld [vmem:[%s2] sm:$0x1]
      %v214 = vlaneseq
      %v215 = vshrl.u32 %v214, 7
      %v216 = vsub.s32 0, %v215
      %v217 = vrot.slane %v212, %v216
      %v251 = vunpack.c.l.b16 %v172
      %v252 = vunpack.c.l.b16 %v173
      %v253 = vunpack.c.l.b16 %v174
      %v254 = vunpack.c.l.b16 %v175
      %v255 = vunpack.c.l.b16 %v176
      %v256 = vunpack.c.l.b16 %v177
      %v257 = vunpack.c.l.b16 %v178
      %v258 = vunpack.c.l.b16 %v179
      %v259 = vunpack.c.l.b16 %v180
      %v260 = vunpack.c.l.b16 %v181
      %v261 = vunpack.c.l.b16 %v182
      %v262 = vunpack.c.l.b16 %v183
      %v263 = vunpack.c.l.b16 %v184
      %v264 = vunpack.c.l.b16 %v185
      %v265 = vunpack.c.l.b16 %v186
      %v266 = vunpack.c.l.b16 %v187
      %v267 = vunpack.c.l.b16 %v188
      %v268 = vunpack.c.l.b16 %v189
      %v269 = vunpack.c.l.b16 %v190
      %v270 = vunpack.c.l.b16 %v191
      %v271 = vunpack.c.l.b16 %v192
      %v272 = vunpack.c.l.b16 %v193
      %v273 = vunpack.c.l.b16 %v194
      %v274 = vunpack.c.l.b16 %v195
      %v275 = vunpack.c.l.b16 %v196
      %v276 = vunpack.c.l.b16 %v197
      %v277 = vunpack.c.l.b16 %v198
      %v278 = vunpack.c.l.b16 %v199
      %v279 = vunpack.c.l.b16 %v200
      %v280 = vunpack.c.l.b16 %v201
      %v281 = vunpack.c.l.b16 %v202
      %v282 = vunpack.c.l.b16 %v203
      %v283 = vpack.c.b16 %v252, %v251
      %v284 = vpack.c.b16 %v254, %v253
      %v285 = vpack.c.b16 %v256, %v255
      %v286 = vpack.c.b16 %v258, %v257
      %v287 = vpack.c.b16 %v260, %v259
      %v288 = vpack.c.b16 %v262, %v261
      %v289 = vpack.c.b16 %v264, %v263
      %v290 = vpack.c.b16 %v266, %v265
      %v291 = vpack.c.b16 %v268, %v267
      %v292 = vpack.c.b16 %v270, %v269
      %v293 = vpack.c.b16 %v272, %v271
      %v294 = vpack.c.b16 %v274, %v273
      %v295 = vpack.c.b16 %v276, %v275
      %v296 = vpack.c.b16 %v278, %v277
      %v297 = vpack.c.b16 %v280, %v279
      %v298 = vpack.c.b16 %v282, %v281
      %v307 = vunpack.c.l.b16 %v204
      %v308 = vunpack.c.l.b16 %v205
      %v309 = vunpack.c.l.b16 %v206
      %v310 = vunpack.c.l.b16 %v207
      %v311 = vunpack.c.l.b16 %v208
      %v312 = vunpack.c.l.b16 %v209
      %v313 = vunpack.c.l.b16 %v210
      %v314 = vunpack.c.l.b16 %v211
      %v315 = vpack.c.b16 %v308, %v307
      %v316 = vpack.c.b16 %v310, %v309
      %v317 = vpack.c.b16 %v312, %v311
      %v318 = vpack.c.b16 %v314, %v313
      %vm323 = vcmask 523264
      %v325 = vsel %vm323, %v283, 0
      %v328 = vsel %vm323, %v284, 0
      %v331 = vsel %vm323, %v285, 0
      %v334 = vsel %vm323, %v286, 0
      %v337 = vsel %vm323, %v287, 0
      %v340 = vsel %vm323, %v288, 0
      %v343 = vsel %vm323, %v289, 0
      %v346 = vsel %vm323, %v290, 0
      %v349 = vsel %vm323, %v291, 0
      %v352 = vsel %vm323, %v292, 0
      %v355 = vsel %vm323, %v293, 0
      %v358 = vsel %vm323, %v294, 0
      %v361 = vsel %vm323, %v295, 0
      %v364 = vsel %vm323, %v296, 0
      %v367 = vsel %vm323, %v297, 0
      %v370 = vsel %vm323, %v298, 0
      %372 = vmatprep.subr.bf16.mxu0 0
      %373 = vmatpush1.bf16.msra.mxu0 %v315
      %374 = vmatprep.subr.bf16.mxu0 0
      %375 = vmatpush1.bf16.msra.mxu0 %v316
      %376 = vmatprep.subr.bf16.mxu0 0
      %377 = vmatpush1.bf16.msra.mxu0 %v317
      %378 = vmatprep.subr.bf16.mxu0 0
      %379 = vmatpush1.bf16.msra.mxu0 %v318
      %380 = vmatprep.subr.bf16.mxu0 0
      %381 = vmatpush1.bf16.msra.mxu0 0
      %382 = vmatprep.subr.bf16.mxu0 0
      %383 = vmatpush1.bf16.msra.mxu0 0
      %384 = vmatprep.subr.bf16.mxu0 0
      %385 = vmatpush1.bf16.msra.mxu0 0
      %386 = vmatprep.subr.bf16.mxu0 0
      %387 = vmatpush1.bf16.msra.mxu0 0
      %388 = vmatprep.subr.bf16.mxu0 0
      %389 = vmatpush1.bf16.msra.mxu0 0
      %390 = vmatprep.subr.bf16.mxu0 0
      %391 = vmatpush1.bf16.msra.mxu0 0
      %392 = vmatprep.subr.bf16.mxu0 0
      %393 = vmatpush1.bf16.msra.mxu0 0
      %394 = vmatprep.subr.bf16.mxu0 0
      %395 = vmatpush1.bf16.msra.mxu0 0
      %396 = vmatprep.subr.bf16.mxu0 0
      %397 = vmatpush1.bf16.msra.mxu0 0
      %398 = vmatprep.subr.bf16.mxu0 0
      %399 = vmatpush1.bf16.msra.mxu0 0
      %400 = vmatprep.subr.bf16.mxu0 0
      %401 = vmatpush1.bf16.msra.mxu0 0
      %402 = vmatprep.subr.bf16.mxu0 0
      %403 = vmatpush1.bf16.msra.mxu0 0
      %404 = vmatprep.mubr.bf16.mxu0 0
      %405 = vmatmul.mubr.bf16.gmra.mrb[0].mxu0 %v325
      %v406 = vpop.f32.mrb[0].mxu0
      %v407 = vadd.f32 %v217, %v406
      %v408 = vpop.f32.mrb[0].mxu0
      %v409 = vpop.f32.mrb[0].mxu0
      %v410 = vadd.f32 %v217, %v409
      %v411 = vpop.f32.mrb[0].mxu0
      %412 = vmatprep.mubr.bf16.mxu0 0
      %413 = vmatmul.mubr.bf16.gmra.mrb[0].mxu0 %v328
      %v414 = vpop.f32.mrb[0].mxu0
      %v415 = vadd.f32 %v217, %v414
      %v416 = vpop.f32.mrb[0].mxu0
      %v417 = vpop.f32.mrb[0].mxu0
      %v418 = vadd.f32 %v217, %v417
      %v419 = vpop.f32.mrb[0].mxu0
      %420 = vmatprep.mubr.bf16.mxu0 0
      %421 = vmatmul.mubr.bf16.gmra.mrb[0].mxu0 %v331
      %v422 = vpop.f32.mrb[0].mxu0
      %v423 = vadd.f32 %v217, %v422
      %v424 = vpop.f32.mrb[0].mxu0
      %v425 = vpop.f32.mrb[0].mxu0
      %v426 = vadd.f32 %v217, %v425
      %v427 = vpop.f32.mrb[0].mxu0
      %428 = vmatprep.mubr.bf16.mxu0 0
      %429 = vmatmul.mubr.bf16.gmra.mrb[0].mxu0 %v334
      %v430 = vpop.f32.mrb[0].mxu0
      %v431 = vadd.f32 %v217, %v430
      %v432 = vpop.f32.mrb[0].mxu0
      %v433 = vpop.f32.mrb[0].mxu0
      %v434 = vadd.f32 %v217, %v433
      %v435 = vpop.f32.mrb[0].mxu0
      %436 = vmatprep.mubr.bf16.mxu0 0
      %437 = vmatmul.mubr.bf16.gmra.mrb[0].mxu0 %v337
      %v438 = vpop.f32.mrb[0].mxu0
      %v439 = vadd.f32 %v217, %v438
      %v440 = vpop.f32.mrb[0].mxu0
      %v441 = vpop.f32.mrb[0].mxu0
      %v442 = vadd.f32 %v217, %v441
      %v443 = vpop.f32.mrb[0].mxu0
      %444 = vmatprep.mubr.bf16.mxu0 0
      %445 = vmatmul.mubr.bf16.gmra.mrb[0].mxu0 %v340
      %v446 = vpop.f32.mrb[0].mxu0
      %v447 = vadd.f32 %v217, %v446
      %v448 = vpop.f32.mrb[0].mxu0
      %v449 = vpop.f32.mrb[0].mxu0
      %v450 = vadd.f32 %v217, %v449
      %v451 = vpop.f32.mrb[0].mxu0
      %452 = vmatprep.mubr.bf16.mxu0 0
      %453 = vmatmul.mubr.bf16.gmra.mrb[0].mxu0 %v343
      %v454 = vpop.f32.mrb[0].mxu0
      %v455 = vadd.f32 %v217, %v454
      %v456 = vpop.f32.mrb[0].mxu0
      %v457 = vpop.f32.mrb[0].mxu0
      %v458 = vadd.f32 %v217, %v457
      %v459 = vpop.f32.mrb[0].mxu0
      %460 = vmatprep.mubr.bf16.mxu0 0
      %461 = vmatmul.mubr.bf16.gmra.mrb[0].mxu0 %v346
      %v462 = vpop.f32.mrb[0].mxu0
      %v463 = vadd.f32 %v217, %v462
      %v464 = vpop.f32.mrb[0].mxu0
      %v465 = vpop.f32.mrb[0].mxu0
      %v466 = vadd.f32 %v217, %v465
      %v467 = vpop.f32.mrb[0].mxu0
      %468 = vmatprep.mubr.bf16.mxu0 0
      %469 = vmatmul.mubr.bf16.gmra.mrb[0].mxu0 %v349
      %v470 = vpop.f32.mrb[0].mxu0
      %v471 = vadd.f32 %v217, %v470
      %v472 = vpop.f32.mrb[0].mxu0
      %v473 = vpop.f32.mrb[0].mxu0
      %v474 = vadd.f32 %v217, %v473
      %v475 = vpop.f32.mrb[0].mxu0
      %476 = vmatprep.mubr.bf16.mxu0 0
      %477 = vmatmul.mubr.bf16.gmra.mrb[0].mxu0 %v352
      %v478 = vpop.f32.mrb[0].mxu0
      %v479 = vadd.f32 %v217, %v478
      %v480 = vpop.f32.mrb[0].mxu0
      %v481 = vpop.f32.mrb[0].mxu0
      %v482 = vadd.f32 %v217, %v481
      %v483 = vpop.f32.mrb[0].mxu0
      %484 = vmatprep.mubr.bf16.mxu0 0
      %485 = vmatmul.mubr.bf16.gmra.mrb[0].mxu0 %v355
      %v486 = vpop.f32.mrb[0].mxu0
      %v487 = vadd.f32 %v217, %v486
      %v488 = vpop.f32.mrb[0].mxu0
      %v489 = vpop.f32.mrb[0].mxu0
      %v490 = vadd.f32 %v217, %v489
      %v491 = vpop.f32.mrb[0].mxu0
      %492 = vmatprep.mubr.bf16.mxu0 0
      %493 = vmatmul.mubr.bf16.gmra.mrb[0].mxu0 %v358
      %v494 = vpop.f32.mrb[0].mxu0
      %v495 = vadd.f32 %v217, %v494
      %v496 = vpop.f32.mrb[0].mxu0
      %v497 = vpop.f32.mrb[0].mxu0
      %v498 = vadd.f32 %v217, %v497
      %v499 = vpop.f32.mrb[0].mxu0
      %500 = vmatprep.mubr.bf16.mxu0 0
      %501 = vmatmul.mubr.bf16.gmra.mrb[0].mxu0 %v361
      %v502 = vpop.f32.mrb[0].mxu0
      %v503 = vadd.f32 %v217, %v502
      %v504 = vpop.f32.mrb[0].mxu0
      %v505 = vpop.f32.mrb[0].mxu0
      %v506 = vadd.f32 %v217, %v505
      %v507 = vpop.f32.mrb[0].mxu0
      %508 = vmatprep.mubr.bf16.mxu0 0
      %509 = vmatmul.mubr.bf16.gmra.mrb[0].mxu0 %v364
      %v510 = vpop.f32.mrb[0].mxu0
      %v511 = vadd.f32 %v217, %v510
      %v512 = vpop.f32.mrb[0].mxu0
      %v513 = vpop.f32.mrb[0].mxu0
      %v514 = vadd.f32 %v217, %v513
      %v515 = vpop.f32.mrb[0].mxu0
      %516 = vmatprep.mubr.bf16.mxu0 0
      %517 = vmatmul.mubr.bf16.gmra.mrb[0].mxu0 %v367
      %v518 = vpop.f32.mrb[0].mxu0
      %v519 = vadd.f32 %v217, %v518
      %v520 = vpop.f32.mrb[0].mxu0
      %v521 = vpop.f32.mrb[0].mxu0
      %v522 = vadd.f32 %v217, %v521
      %v523 = vpop.f32.mrb[0].mxu0
      %524 = vmatprep.mubr.bf16.mxu0 0
      %525 = vmatmul.mubr.bf16.gmra.mrb[0].mxu0 %v370
      %v526 = vpop.f32.mrb[0].mxu0
      %v527 = vadd.f32 %v217, %v526
      %v528 = vpop.f32.mrb[0].mxu0
      %v529 = vpop.f32.mrb[0].mxu0
      %v530 = vadd.f32 %v217, %v529
      %v531 = vpop.f32.mrb[0].mxu0
      %532 = vdwg.mxu0
      %v533 = vmax.f32 %v407, 0.0
      %v534 = vmax.f32 %v410, 0.0
      %v535 = vmax.f32 %v415, 0.0
      %v536 = vmax.f32 %v418, 0.0
      %v537 = vmax.f32 %v423, 0.0
      %v538 = vmax.f32 %v426, 0.0
      %v539 = vmax.f32 %v431, 0.0
      %v540 = vmax.f32 %v434, 0.0
      %v541 = vmax.f32 %v439, 0.0
      %v542 = vmax.f32 %v442, 0.0
      %v543 = vmax.f32 %v447, 0.0
      %v544 = vmax.f32 %v450, 0.0
      %v545 = vmax.f32 %v455, 0.0
      %v546 = vmax.f32 %v458, 0.0
      %v547 = vmax.f32 %v463, 0.0
      %v548 = vmax.f32 %v466, 0.0
      %v549 = vmax.f32 %v471, 0.0
      %v550 = vmax.f32 %v474, 0.0
      %v551 = vmax.f32 %v479, 0.0
      %v552 = vmax.f32 %v482, 0.0
      %v553 = vmax.f32 %v487, 0.0
      %v554 = vmax.f32 %v490, 0.0
      %v555 = vmax.f32 %v495, 0.0
      %v556 = vmax.f32 %v498, 0.0
      %v557 = vmax.f32 %v503, 0.0
      %v558 = vmax.f32 %v506, 0.0
      %v559 = vmax.f32 %v511, 0.0
      %v560 = vmax.f32 %v514, 0.0
      %v561 = vmax.f32 %v519, 0.0
      %v562 = vmax.f32 %v522, 0.0
      %v563 = vmax.f32 %v527, 0.0
      %v564 = vmax.f32 %v530, 0.0
      %v565 = vpack.c.bf16 %v534, %v533
      %v566 = vpack.c.bf16 %v536, %v535
      %v567 = vpack.c.bf16 %v538, %v537
      %v568 = vpack.c.bf16 %v540, %v539
      %v569 = vpack.c.bf16 %v542, %v541
      %v570 = vpack.c.bf16 %v544, %v543
      %v571 = vpack.c.bf16 %v546, %v545
      %v572 = vpack.c.bf16 %v548, %v547
      %v573 = vpack.c.bf16 %v550, %v549
      %v574 = vpack.c.bf16 %v552, %v551
      %v575 = vpack.c.bf16 %v554, %v553
      %v576 = vpack.c.bf16 %v556, %v555
      %v577 = vpack.c.bf16 %v558, %v557
      %v578 = vpack.c.bf16 %v560, %v559
      %v579 = vpack.c.bf16 %v562, %v561
      %v580 = vpack.c.bf16 %v564, %v563
      %v597 = vunpack.c.l.b16 %v565
      %v598 = vunpack.c.h.b16 %v565
      %v599 = vunpack.c.l.b16 %v566
      %v600 = vunpack.c.h.b16 %v566
      %v601 = vunpack.c.l.b16 %v567
      %v602 = vunpack.c.h.b16 %v567
      %v603 = vunpack.c.l.b16 %v568
      %v604 = vunpack.c.h.b16 %v568
      %v605 = vunpack.c.l.b16 %v569
      %v606 = vunpack.c.h.b16 %v569
      %v607 = vunpack.c.l.b16 %v570
      %v608 = vunpack.c.h.b16 %v570
      %v609 = vunpack.c.l.b16 %v571
      %v610 = vunpack.c.h.b16 %v571
      %v611 = vunpack.c.l.b16 %v572
      %v612 = vunpack.c.h.b16 %v572
      %v613 = vunpack.c.l.b16 %v573
      %v614 = vunpack.c.h.b16 %v573
      %v615 = vunpack.c.l.b16 %v574
      %v616 = vunpack.c.h.b16 %v574
      %v617 = vunpack.c.l.b16 %v575
      %v618 = vunpack.c.h.b16 %v575
      %v619 = vunpack.c.l.b16 %v576
      %v620 = vunpack.c.h.b16 %v576
      %v621 = vunpack.c.l.b16 %v577
      %v622 = vunpack.c.h.b16 %v577
      %v623 = vunpack.c.l.b16 %v578
      %v624 = vunpack.c.h.b16 %v578
      %v625 = vunpack.c.l.b16 %v579
      %v626 = vunpack.c.h.b16 %v579
      %v627 = vunpack.c.l.b16 %v580
      %v628 = vunpack.c.h.b16 %v580
      %v629 = vpack.c.b16 %v597, %v597
      %v630 = vpack.c.b16 %v598, %v598
      %v631 = vpack.c.b16 %v599, %v599
      %v632 = vpack.c.b16 %v600, %v600
      %v633 = vpack.c.b16 %v601, %v601
      %v634 = vpack.c.b16 %v602, %v602
      %v635 = vpack.c.b16 %v603, %v603
      %v636 = vpack.c.b16 %v604, %v604
      %v637 = vpack.c.b16 %v605, %v605
      %v638 = vpack.c.b16 %v606, %v606
      %v639 = vpack.c.b16 %v607, %v607
      %v640 = vpack.c.b16 %v608, %v608
      %v641 = vpack.c.b16 %v609, %v609
      %v642 = vpack.c.b16 %v610, %v610
      %v643 = vpack.c.b16 %v611, %v611
      %v644 = vpack.c.b16 %v612, %v612
      %v645 = vpack.c.b16 %v613, %v613
      %v646 = vpack.c.b16 %v614, %v614
      %v647 = vpack.c.b16 %v615, %v615
      %v648 = vpack.c.b16 %v616, %v616
      %v649 = vpack.c.b16 %v617, %v617
      %v650 = vpack.c.b16 %v618, %v618
      %v651 = vpack.c.b16 %v619, %v619
      %v652 = vpack.c.b16 %v620, %v620
      %v653 = vpack.c.b16 %v621, %v621
      %v654 = vpack.c.b16 %v622, %v622
      %v655 = vpack.c.b16 %v623, %v623
      %v656 = vpack.c.b16 %v624, %v624
      %v657 = vpack.c.b16 %v625, %v625
      %v658 = vpack.c.b16 %v626, %v626
      %v659 = vpack.c.b16 %v627, %v627
      %v660 = vpack.c.b16 %v628, %v628
      %vm693 = vcmask 257024
      %694 = vst.msk [vmem:[%s170] sm:$0xf] %vm693, %v629
      %695 = vst.msk [vmem:[%s170 + $0x4] sm:$0xf] %vm693, %v630
      %696 = vst.msk [vmem:[%s170 + $0x8] sm:$0xf] %vm693, %v631
      %697 = vst.msk [vmem:[%s170 + $0xc] sm:$0xf] %vm693, %v632
      %698 = vst.msk [vmem:[%s170 + $0x10] sm:$0xf] %vm693, %v633
      %699 = vst.msk [vmem:[%s170 + $0x14] sm:$0xf] %vm693, %v634
      %700 = vst.msk [vmem:[%s170 + $0x18] sm:$0xf] %vm693, %v635
      %701 = vst.msk [vmem:[%s170 + $0x1c] sm:$0xf] %vm693, %v636
      %702 = vst.msk [vmem:[%s170 + $0x20] sm:$0xf] %vm693, %v637
      %703 = vst.msk [vmem:[%s170 + $0x24] sm:$0xf] %vm693, %v638
      %704 = vst.msk [vmem:[%s170 + $0x28] sm:$0xf] %vm693, %v639
      %705 = vst.msk [vmem:[%s170 + $0x2c] sm:$0xf] %vm693, %v640
      %706 = vst.msk [vmem:[%s170 + $0x30] sm:$0xf] %vm693, %v641
      %707 = vst.msk [vmem:[%s170 + $0x34] sm:$0xf] %vm693, %v642
      %708 = vst.msk [vmem:[%s170 + $0x38] sm:$0xf] %vm693, %v643
      %709 = vst.msk [vmem:[%s170 + $0x3c] sm:$0xf] %vm693, %v644
      %710 = vst.msk [vmem:[%s170 + $0x40] sm:$0xf] %vm693, %v645
      %711 = vst.msk [vmem:[%s170 + $0x44] sm:$0xf] %vm693, %v646
      %712 = vst.msk [vmem:[%s170 + $0x48] sm:$0xf] %vm693, %v647
      %713 = vst.msk [vmem:[%s170 + $0x4c] sm:$0xf] %vm693, %v648
      %714 = vst.msk [vmem:[%s170 + $0x50] sm:$0xf] %vm693, %v649
      %715 = vst.msk [vmem:[%s170 + $0x54] sm:$0xf] %vm693, %v650
      %716 = vst.msk [vmem:[%s170 + $0x58] sm:$0xf] %vm693, %v651
      %717 = vst.msk [vmem:[%s170 + $0x5c] sm:$0xf] %vm693, %v652
      %718 = vst.msk [vmem:[%s170 + $0x60] sm:$0xf] %vm693, %v653
      %719 = vst.msk [vmem:[%s170 + $0x64] sm:$0xf] %vm693, %v654
      %720 = vst.msk [vmem:[%s170 + $0x68] sm:$0xf] %vm693, %v655
      %721 = vst.msk [vmem:[%s170 + $0x6c] sm:$0xf] %vm693, %v656
      %722 = vst.msk [vmem:[%s170 + $0x70] sm:$0xf] %vm693, %v657
      %723 = vst.msk [vmem:[%s170 + $0x74] sm:$0xf] %vm693, %v658
      %724 = vst.msk [vmem:[%s170 + $0x78] sm:$0xf] %vm693, %v659
      %725 = vst.msk [vmem:[%s170 + $0x7c] sm:$0xf] %vm693, %v660
      %p726 = scmp.lt.s32.totalorder %s14, 1
      %s727 = scalar_select %p726, %s14, 1
      %s728 = smul.addr %s727, 32
      %s729 = smul.addr %s728, 4
      %s730 = scalar_lea.vmem %s3, %s729
      // Predicated region
      $region33: #{tpu_custom_call.1} parent=31 // pred_check
        %p731 = pneg %p100
      $region34: #{tpu_custom_call.1} parent=31 // pred_check_branch
        %733 = sbr.rel (%p731) target = $region36
      $region35: #{tpu_custom_call.1} parent=31 // pred_region
        _
      $region36: #{tpu_custom_call.1} parent=31 // pred_fallthru
        _
    $region32: #{tpu_custom_call.1} parent=5 // pred_fallthru
      _
    %p734 = scmp.le.s32.totalorder 2, %s9
    // Predicated region
    $region37: #{tpu_custom_call.1} parent=5 // pred_check
      %p735 = pneg %p734
    $region38: #{tpu_custom_call.1} parent=5 // pred_check_branch
      %737 = sbr.rel (%p735) target = $region40
    $region39: #{tpu_custom_call.1} parent=5 // pred_region
      %s738 = ssub.s32 %s9, 2
      // Predicated region
      $region41: #{tpu_custom_call.1} parent=39 // pred_check
        %p739 = pneg %p106
      $region42: #{tpu_custom_call.1} parent=39 // pred_check_branch
        %741 = sbr.rel (%p739) target = $region44
      $region43: #{tpu_custom_call.1} parent=39 // pred_region
        %p742 = scmp.lt.s32.totalorder %s15, 1
        %s743 = scalar_select %p742, %s15, 1
        %s744 = smul.addr %s743, 32
        %s745 = smul.addr %s744, 4
        %s746 = scalar_lea.vmem %s3, %s745
      $region44: #{tpu_custom_call.1} parent=39 // pred_fallthru
        _
    $region40: #{tpu_custom_call.1} parent=5 // pred_fallthru
      _
  $region6: #{tpu_custom_call.1} parent=0 // loop_footer
    %s13 = sadd.s32 1, %s9
  $region7: #{tpu_custom_call.1} parent=0 // loop_footer_branch
    %8 = sbr.rel target = $region3
  $region8: #{tpu_custom_call.1} parent=0 // loop_exit
    _

</llo_original>
